<compile_context>
chip_gen: v7x
topology: tpu7x:2x2x1
jax: 0.10.0
libtpu: 0.0.40
codegen_flags: <defaults>
</compile_context>

<pallas_src>
import functools
import math

import jax
import jax.numpy as jnp
from jax import lax
from jax.experimental import pallas as pl
from jax.experimental.pallas import tpu as pltpu


def _round_up(x, m):
    return ((x + m - 1) // m) * m


def _dwconv_kernel(x_ref, wb_ref, o_ref, stage_ref, *,
                   kh, kw, pad, stride, h, w, h_out, w_out,
                   off0, cs, acc_w, compact_out):
    """Depthwise conv over a (TN, TC, H*W) tile, spatial flattened on lanes.

    x_ref     : (TN, TC, H*W)   input tile
    wb_ref    : (TC, KH*KW+1)   per-channel taps + bias folded in the last column
    o_ref     : (TN, TC, OUTW)  OUTW = H_out*W_out if compact_out else H*W
    stage_ref : (TC, stage_len) zero-bordered staging buffer (scratch)

    cs    : column stride fused into the tap reads (stride if fused, else 1)
    acc_w : per-row width of the accumulation domain (W_out if fused, else W)
    """
    tn, tc, hw = x_ref.shape
    l_acc = h * acc_w
    ktaps = kh * kw

    wb = wb_ref[...]
    wts = wb[:, :ktaps].astype(jnp.float32)              # (TC, KH*KW)
    bias = wb[:, ktaps:ktaps + 1].astype(jnp.float32)    # (TC, 1)

    # Zero only the borders; the middle [off0, off0+hw) is overwritten per sample.
    front = off0
    back = stage_ref.shape[1] - (off0 + hw)
    if front > 0:
        stage_ref[:, pl.ds(0, front)] = jnp.zeros((tc, front), stage_ref.dtype)
    if back > 0:
        stage_ref[:, pl.ds(off0 + hw, back)] = jnp.zeros((tc, back), stage_ref.dtype)

    # Column-validity masks, one per horizontal offset j (independent of i and of
    # the batch sample -> hoisted).  Only emitted where they can actually fail.
    colx = lax.rem(lax.broadcasted_iota(jnp.int32, (1, l_acc), 1),
                   jnp.int32(acc_w)) * cs                 # input col of tap dj=0
    cmasks = []
    for j in range(kw):
        dj = j - pad
        need_lo = dj < 0
        need_hi = (acc_w - 1) * cs + dj > w - 1
        if not (need_lo or need_hi):
            cmasks.append(None)
            continue
        m = None
        if need_lo:
            m = colx + dj >= 0
        if need_hi:
            mh = colx + dj <= w - 1
            m = mh if m is None else (m & mh)
        cmasks.append(m)

    def process(b):
        # Stage this sample's channel tile inside the zero border.
        stage_ref[:, pl.ds(off0, hw)] = x_ref[b]

        acc = jnp.broadcast_to(bias, (tc, l_acc))         # bias folded into init
        for j in range(kw):
            dj = j - pad
            tap_sum = None
            for i in range(kh):
                di = i - pad
                start = off0 + di * w + dj                # static Python int
                if cs > 1:
                    v = stage_ref[:, pl.ds(start, l_acc, cs)]
                else:
                    v = stage_ref[:, pl.ds(start, l_acc)]
                term = v.astype(jnp.float32) * wts[:, i * kw + j:i * kw + j + 1]
                tap_sum = term if tap_sum is None else tap_sum + term
            # Select BEFORE the masked values are ever used (zero-padding semantics;
            # row under/overflow is handled by the zero borders of the staging buf).
            if cmasks[j] is not None:
                tap_sum = jnp.where(cmasks[j], tap_sum, 0.0)
            acc = acc + tap_sum

        if compact_out:
            if stride == 1 and h_out == h and w_out == acc_w:
                o_ref[b] = acc.astype(o_ref.dtype)        # "same" stride-1: one store
            else:
                for r in range(h_out):                    # contiguous row compaction
                    src = r * stride * acc_w
                    o_ref[b, :, pl.ds(r * w_out, w_out)] = (
                        acc[:, src:src + w_out].astype(o_ref.dtype))
        else:
            o_ref[b] = acc.astype(o_ref.dtype)            # full anchor map (fallback)

    if tn == 1:
        process(0)
    else:
        @pl.loop(0, tn)
        def _(b):
            process(b)


def _pick_tiles(n, c, h, acc_w, hw, itemsize):
    """Channel tile (sublane dim, mult of 8) + batch tile; keep f32 accumulator
    vreg-resident, per-step DMA blocks reasonably big, and the grid >= 2 steps."""
    l_acc = h * acc_w
    acc_budget = 32 * 1024                  # bytes of f32 accumulator per sample
    if c % 8 == 0:
        tc = 8
        while c % (tc * 2) == 0 and (tc * 2) * l_acc * 4 <= acc_budget:
            tc *= 2
    else:
        tc = c
    dma_budget = 2 * 1024 * 1024            # per-step input block bytes
    tn = 1
    while (n % (tn * 2) == 0
           and (tn * 2) * tc * hw * itemsize <= dma_budget
           and (n // (tn * 2)) * (c // tc) >= 2):
        tn *= 2
    # v7x has 2 TensorCores: keep >= 2 (parallel) grid steps when the shape allows.
    if (n // tn) * (c // tc) < 2 and tc % 16 == 0:
        tc //= 2
    return tn, tc


def depthwise_conv2d(x_nchw, weight, bias, *, stride=1, padding=1):
    """Matches nn.Conv2d(C, C, k, stride, padding, groups=C, bias=True) forward.

    x_nchw : (N, C, H, W) float32
    weight : (C, 1, KH, KW) float32 (PyTorch depthwise layout)
    bias   : (C,) float32
    """
    n, c, h, w = x_nchw.shape
    c_out_ch, c_per_group, kh, kw = weight.shape
    assert c_out_ch == c and c_per_group == 1, "depthwise requires groups == C"
    # TODO(synk): extend the anchor grid for padding > (k-1)//2 (unused by the model).
    assert 2 * padding <= kh - 1 and 2 * padding <= kw - 1

    h_out = (h + 2 * padding - kh) // stride + 1
    w_out = (w + 2 * padding - kw) // stride + 1
    hw = h * w
    hwo = h_out * w_out
    itemsize = jnp.dtype(x_nchw.dtype).itemsize

    # Free contiguous-dim reshapes only; no transpose / pad pass over HBM.
    x_flat = x_nchw.reshape(n, c, hw)
    wb = jnp.concatenate(
        [weight.reshape(c, kh * kw).astype(x_nchw.dtype),
         bias.reshape(c, 1).astype(x_nchw.dtype)], axis=1)      # (C, KH*KW+1)

    # Staging geometry: x sits at a 128-aligned offset inside zero borders large
    # enough that every tap's (possibly strided) read stays inside the buffer.
    off0 = _round_up(padding * (w + 1), 128)
    max_s = max(kh - 1 - padding, 0) * w + max(kw - 1 - padding, 0)
    stage_len = _round_up(off0 + hw + max_s, 128)

    def run(fuse_cols):
        cs = stride if fuse_cols else 1
        acc_w = w_out if fuse_cols else w
        compact_out = fuse_cols or stride == 1
        out_cols = hwo if compact_out else hw
        tn, tc = _pick_tiles(n, c, h, acc_w, hw, itemsize)

        # Per-step VMEM: double-buffered in/out blocks + staging scratch + weights.
        footprint = (2 * tn * tc * hw * itemsize + 2 * tn * tc * out_cols * itemsize
                     + tc * stage_len * itemsize + 2 * tc * (kh * kw + 1) * itemsize)
        assert footprint < 40 * 1024 * 1024  # well under v7x's 64 MiB VMEM

        kernel = functools.partial(
            _dwconv_kernel, kh=kh, kw=kw, pad=padding, stride=stride,
            h=h, w=w, h_out=h_out, w_out=w_out,
            off0=off0, cs=cs, acc_w=acc_w, compact_out=compact_out)

        out = pl.pallas_call(
            kernel,
            out_shape=jax.ShapeDtypeStruct((n, c, out_cols), x_nchw.dtype),
            grid_spec=pltpu.PrefetchScalarGridSpec(
                num_scalar_prefetch=0,
                grid=(n // tn, c // tc),
                in_specs=[
                    pl.BlockSpec((tn, tc, hw), lambda bi, ci: (bi, ci, 0)),
                    pl.BlockSpec((tc, kh * kw + 1), lambda bi, ci: (ci, 0)),
                ],
                out_specs=pl.BlockSpec((tn, tc, out_cols),
                                       lambda bi, ci: (bi, ci, 0)),
                scratch_shapes=[pltpu.VMEM((tc, stage_len), x_nchw.dtype)],
            ),
            compiler_params=pltpu.CompilerParams(
                dimension_semantics=("parallel", "parallel"),
                vmem_limit_bytes=48 * 1024 * 1024),
            cost_estimate=pl.CostEstimate(
                flops=2 * n * c * hwo * kh * kw,
                transcendentals=0,
                bytes_accessed=(n * c * hw + n * c * out_cols
                                + c * (kh * kw + 1)) * itemsize),
        )(x_flat, wb)
        return out, compact_out

    if stride > 1 and w_out * stride == w:
        try:
            out, compact = run(True)            # fused column stride (lane-strided reads)
            out = jax.block_until_ready(out)
        except Exception:
            # TODO(synk): defensive fallback if lane-strided ref reads fail to lower
            # on some generation; emits the full anchor map + one wrapper-side slice.
            out, compact = run(False)
    else:
        out, compact = run(False)

    if compact:
        return out.reshape(n, c, h_out, w_out)
    z = out.reshape(n, c, h, w)
    return z[:, :, 0:(h_out - 1) * stride + 1:stride,
             0:(w_out - 1) * stride + 1:stride]


def init_params(key, in_channels, kernel_size):
    """Matches the module init: kaiming_uniform_ weight, zero bias."""
    kh = kw = kernel_size
    fan_in = 1 * kh * kw
    gain = math.sqrt(2.0)
    bound = gain * math.sqrt(3.0 / fan_in)
    weight = jax.random.uniform(
        key, (in_channels, 1, kh, kw), minval=-bound, maxval=bound,
        dtype=jnp.float32)
    bias = jnp.zeros((in_channels,), dtype=jnp.float32)
    return weight, bias


if __name__ == "__main__":
    key = jax.random.PRNGKey(0)
    kx, kw_, kb = jax.random.split(key, 3)

    N, C, H, W = 2, 16, 16, 16
    KSIZE, PAD = 3, 1

    x = jax.random.normal(kx, (N, C, H, W), dtype=jnp.float32)
    weight, _zero_bias = init_params(kw_, C, KSIZE)
    # Non-zero bias to exercise the bias path (the module init uses zeros).
    bias = 0.1 * jax.random.normal(kb, (C,), dtype=jnp.float32)

    for stride in (1, 2):
        out = depthwise_conv2d(x, weight, bias, stride=stride, padding=PAD)
        out = jax.block_until_ready(out)

        ref = lax.conv_general_dilated(
            x, weight,
            window_strides=(stride, stride),
            padding=((PAD, PAD), (PAD, PAD)),
            dimension_numbers=("NCHW", "OIHW", "NCHW"),
            feature_group_count=C,
        ) + bias[None, :, None, None]

        assert out.shape == ref.shape, (out.shape, ref.shape)
        assert jnp.allclose(out, ref, atol=1e-5, rtol=1e-5), float(
            jnp.max(jnp.abs(out - ref)))

    print("KERNEL_OK")
</pallas_src>

<mosaic_0001>
module attributes {stable_mosaic.version = 11 : i64} {
  func.func @_dwconv_kernel(%arg0: i32, %arg1: i32, %arg2: memref<1x16x256xf32, #tpu.memory_space<vmem>>, %arg3: memref<16x10xf32, #tpu.memory_space<vmem>>, %arg4: memref<1x16x256xf32, #tpu.memory_space<vmem>>, %arg5: memref<16x512xf32, #tpu.memory_space<vmem>>) attributes {dimension_semantics = [#tpu.dimension_semantics<parallel>, #tpu.dimension_semantics<parallel>], iteration_bounds = array<i64: 2, 1>, scalar_prefetch = 0 : i64, scratch_operands = 1 : i64, tpu.core_type = #tpu.core_type<tc>, window_params = [{transform_indices = @transform_0, window_bounds = array<i64: 1, 16, 256>}, {transform_indices = @transform_1, window_bounds = array<i64: 16, 10>}, {transform_indices = @transform_2, window_bounds = array<i64: 1, 16, 256>}]} {
    %c0 = arith.constant 0 : index
    %c0_0 = arith.constant 0 : index
    %0 = vector.load %arg3[%c0, %c0_0] : memref<16x10xf32, #tpu.memory_space<vmem>>, vector<16x10xf32>
    %1 = vector.extract_strided_slice %0 {offsets = [0, 0], sizes = [16, 9], strides = [1, 1]} : vector<16x10xf32> to vector<16x9xf32>
    %2 = vector.extract_strided_slice %0 {offsets = [0, 9], sizes = [16, 1], strides = [1, 1]} : vector<16x10xf32> to vector<16x1xf32>
    %cst = arith.constant 0.000000e+00 : f32
    %3 = vector.broadcast %cst : f32 to vector<16x128xf32>
    %c0_1 = arith.constant 0 : index
    %c0_2 = arith.constant 0 : index
    %4 = vector.load %arg5[%c0_1, %c0_2] : memref<16x512xf32, #tpu.memory_space<vmem>>, vector<16x128xf32>
    tpu.vector_store %arg5[%c0_1, %c0_2], %3 {strides = array<i32>} : memref<16x512xf32, #tpu.memory_space<vmem>>, vector<16x128xf32>,
    %cst_3 = arith.constant 0.000000e+00 : f32
    %5 = vector.broadcast %cst_3 : f32 to vector<16x128xf32>
    %c0_4 = arith.constant 0 : index
    %c384 = arith.constant 384 : index
    %6 = vector.load %arg5[%c0_4, %c384] : memref<16x512xf32, #tpu.memory_space<vmem>>, vector<16x128xf32>
    tpu.vector_store %arg5[%c0_4, %c384], %5 {strides = array<i32>} : memref<16x512xf32, #tpu.memory_space<vmem>>, vector<16x128xf32>,
    %7 = tpu.iota {dimensions = array<i32: 1>} : vector<1x256xi32>
    %c16_i32 = arith.constant 16 : i32
    %8 = vector.broadcast %c16_i32 : i32 to vector<1x256xi32>
    %9 = arith.remsi %7, %8 : vector<1x256xi32>
    %c1_i32 = arith.constant 1 : i32
    %10 = vector.broadcast %c1_i32 : i32 to vector<1x256xi32>
    %11 = arith.muli %9, %10 : vector<1x256xi32>
    %c-1_i32 = arith.constant -1 : i32
    %12 = vector.broadcast %c-1_i32 : i32 to vector<1x256xi32>
    %13 = arith.addi %11, %12 : vector<1x256xi32>
    %c0_i32 = arith.constant 0 : i32
    %14 = vector.broadcast %c0_i32 : i32 to vector<1x256xi32>
    %15 = arith.cmpi sge, %13, %14 : vector<1x256xi32>
    %c1_i32_5 = arith.constant 1 : i32
    %16 = vector.broadcast %c1_i32_5 : i32 to vector<1x256xi32>
    %17 = arith.addi %11, %16 : vector<1x256xi32>
    %c15_i32 = arith.constant 15 : i32
    %18 = vector.broadcast %c15_i32 : i32 to vector<1x256xi32>
    %19 = arith.cmpi sle, %17, %18 : vector<1x256xi32>
    %c0_6 = arith.constant 0 : index
    %c0_7 = arith.constant 0 : index
    %c0_8 = arith.constant 0 : index
    %20 = vector.load %arg2[%c0_6, %c0_7, %c0_8] : memref<1x16x256xf32, #tpu.memory_space<vmem>>, vector<1x16x256xf32>
    %21 = vector.shape_cast %20 : vector<1x16x256xf32> to vector<16x256xf32>
    %c0_9 = arith.constant 0 : index
    %c128 = arith.constant 128 : index
    %22 = vector.load %arg5[%c0_9, %c128] : memref<16x512xf32, #tpu.memory_space<vmem>>, vector<16x256xf32>
    tpu.vector_store %arg5[%c0_9, %c128], %21 {strides = array<i32>} : memref<16x512xf32, #tpu.memory_space<vmem>>, vector<16x256xf32>,
    %23 = vector.shape_cast %2 : vector<16x1xf32> to vector<16x1xf32>
    %24 = vector.broadcast %23 : vector<16x1xf32> to vector<16x256xf32>
    %c0_10 = arith.constant 0 : index
    %c111 = arith.constant 111 : index
    %25 = vector.load %arg5[%c0_10, %c111] : memref<16x512xf32, #tpu.memory_space<vmem>>, vector<16x256xf32>
    %26 = vector.extract_strided_slice %1 {offsets = [0, 0], sizes = [16, 1], strides = [1, 1]} : vector<16x9xf32> to vector<16x1xf32>
    %27 = vector.broadcast %26 : vector<16x1xf32> to vector<16x256xf32>
    %28 = arith.mulf %25, %27 : vector<16x256xf32>
    %c0_11 = arith.constant 0 : index
    %c127 = arith.constant 127 : index
    %29 = vector.load %arg5[%c0_11, %c127] : memref<16x512xf32, #tpu.memory_space<vmem>>, vector<16x256xf32>
    %30 = vector.extract_strided_slice %1 {offsets = [0, 3], sizes = [16, 1], strides = [1, 1]} : vector<16x9xf32> to vector<16x1xf32>
    %31 = vector.broadcast %30 : vector<16x1xf32> to vector<16x256xf32>
    %32 = arith.mulf %29, %31 : vector<16x256xf32>
    %33 = arith.addf %28, %32 : vector<16x256xf32>
    %c0_12 = arith.constant 0 : index
    %c143 = arith.constant 143 : index
    %34 = vector.load %arg5[%c0_12, %c143] : memref<16x512xf32, #tpu.memory_space<vmem>>, vector<16x256xf32>
    %35 = vector.extract_strided_slice %1 {offsets = [0, 6], sizes = [16, 1], strides = [1, 1]} : vector<16x9xf32> to vector<16x1xf32>
    %36 = vector.broadcast %35 : vector<16x1xf32> to vector<16x256xf32>
    %37 = arith.mulf %34, %36 : vector<16x256xf32>
    %38 = arith.addf %33, %37 : vector<16x256xf32>
    %cst_13 = arith.constant 0.000000e+00 : f32
    %39 = vector.shape_cast %15 : vector<1x256xi1> to vector<1x256xi1>
    %40 = vector.broadcast %39 : vector<1x256xi1> to vector<16x256xi1>
    %41 = vector.broadcast %cst_13 : f32 to vector<16x256xf32>
    %42 = arith.select %40, %38, %41 : vector<16x256xi1>, vector<16x256xf32>
    %43 = arith.addf %24, %42 : vector<16x256xf32>
    %c0_14 = arith.constant 0 : index
    %c112 = arith.constant 112 : index
    %44 = vector.load %arg5[%c0_14, %c112] : memref<16x512xf32, #tpu.memory_space<vmem>>, vector<16x256xf32>
    %45 = vector.extract_strided_slice %1 {offsets = [0, 1], sizes = [16, 1], strides = [1, 1]} : vector<16x9xf32> to vector<16x1xf32>
    %46 = vector.broadcast %45 : vector<16x1xf32> to vector<16x256xf32>
    %47 = arith.mulf %44, %46 : vector<16x256xf32>
    %c0_15 = arith.constant 0 : index
    %c128_16 = arith.constant 128 : index
    %48 = vector.load %arg5[%c0_15, %c128_16] : memref<16x512xf32, #tpu.memory_space<vmem>>, vector<16x256xf32>
    %49 = vector.extract_strided_slice %1 {offsets = [0, 4], sizes = [16, 1], strides = [1, 1]} : vector<16x9xf32> to vector<16x1xf32>
    %50 = vector.broadcast %49 : vector<16x1xf32> to vector<16x256xf32>
    %51 = arith.mulf %48, %50 : vector<16x256xf32>
    %52 = arith.addf %47, %51 : vector<16x256xf32>
    %c0_17 = arith.constant 0 : index
    %c144 = arith.constant 144 : index
    %53 = vector.load %arg5[%c0_17, %c144] : memref<16x512xf32, #tpu.memory_space<vmem>>, vector<16x256xf32>
    %54 = vector.extract_strided_slice %1 {offsets = [0, 7], sizes = [16, 1], strides = [1, 1]} : vector<16x9xf32> to vector<16x1xf32>
    %55 = vector.broadcast %54 : vector<16x1xf32> to vector<16x256xf32>
    %56 = arith.mulf %53, %55 : vector<16x256xf32>
    %57 = arith.addf %52, %56 : vector<16x256xf32>
    %58 = arith.addf %43, %57 : vector<16x256xf32>
    %c0_18 = arith.constant 0 : index
    %c113 = arith.constant 113 : index
    %59 = vector.load %arg5[%c0_18, %c113] : memref<16x512xf32, #tpu.memory_space<vmem>>, vector<16x256xf32>
    %60 = vector.extract_strided_slice %1 {offsets = [0, 2], sizes = [16, 1], strides = [1, 1]} : vector<16x9xf32> to vector<16x1xf32>
    %61 = vector.broadcast %60 : vector<16x1xf32> to vector<16x256xf32>
    %62 = arith.mulf %59, %61 : vector<16x256xf32>
    %c0_19 = arith.constant 0 : index
    %c129 = arith.constant 129 : index
    %63 = vector.load %arg5[%c0_19, %c129] : memref<16x512xf32, #tpu.memory_space<vmem>>, vector<16x256xf32>
    %64 = vector.extract_strided_slice %1 {offsets = [0, 5], sizes = [16, 1], strides = [1, 1]} : vector<16x9xf32> to vector<16x1xf32>
    %65 = vector.broadcast %64 : vector<16x1xf32> to vector<16x256xf32>
    %66 = arith.mulf %63, %65 : vector<16x256xf32>
    %67 = arith.addf %62, %66 : vector<16x256xf32>
    %c0_20 = arith.constant 0 : index
    %c145 = arith.constant 145 : index
    %68 = vector.load %arg5[%c0_20, %c145] : memref<16x512xf32, #tpu.memory_space<vmem>>, vector<16x256xf32>
    %69 = vector.extract_strided_slice %1 {offsets = [0, 8], sizes = [16, 1], strides = [1, 1]} : vector<16x9xf32> to vector<16x1xf32>
    %70 = vector.broadcast %69 : vector<16x1xf32> to vector<16x256xf32>
    %71 = arith.mulf %68, %70 : vector<16x256xf32>
    %72 = arith.addf %67, %71 : vector<16x256xf32>
    %cst_21 = arith.constant 0.000000e+00 : f32
    %73 = vector.shape_cast %19 : vector<1x256xi1> to vector<1x256xi1>
    %74 = vector.broadcast %73 : vector<1x256xi1> to vector<16x256xi1>
    %75 = vector.broadcast %cst_21 : f32 to vector<16x256xf32>
    %76 = arith.select %74, %72, %75 : vector<16x256xi1>, vector<16x256xf32>
    %77 = arith.addf %58, %76 : vector<16x256xf32>
    %c0_22 = arith.constant 0 : index
    %c0_23 = arith.constant 0 : index
    %c0_24 = arith.constant 0 : index
    %78 = vector.load %arg4[%c0_22, %c0_23, %c0_24] : memref<1x16x256xf32, #tpu.memory_space<vmem>>, vector<1x16x256xf32>
    %79 = vector.shape_cast %78 : vector<1x16x256xf32> to vector<16x256xf32>
    %80 = vector.shape_cast %77 : vector<16x256xf32> to vector<1x16x256xf32>
    tpu.vector_store %arg4[%c0_22, %c0_23, %c0_24], %80 {strides = array<i32>} : memref<1x16x256xf32, #tpu.memory_space<vmem>>, vector<1x16x256xf32>,
    return
  }
  func.func @transform_0(%arg0: i32, %arg1: i32) -> (i32, i32, i32) {
    %c0_i32 = arith.constant 0 : i32
    %c0_i32_0 = arith.constant 0 : i32
    return %arg0, %arg1, %c0_i32 : i32, i32, i32
  }
  func.func @transform_1(%arg0: i32, %arg1: i32) -> (i32, i32) {
    %c0_i32 = arith.constant 0 : i32
    %c0_i32_0 = arith.constant 0 : i32
    return %arg1, %c0_i32 : i32, i32
  }
  func.func @transform_2(%arg0: i32, %arg1: i32) -> (i32, i32, i32) {
    %c0_i32 = arith.constant 0 : i32
    %c0_i32_0 = arith.constant 0 : i32
    return %arg0, %arg1, %c0_i32 : i32, i32, i32
  }
}

</mosaic_0001>

<llo_original>
// kernel: tpu_custom_call.1
$region0: #{tpu_custom_call.1}
  #allocation0 [shape = 'u32[]', space=smem, size = 0x4, offset = 0x4, fixed_abs, tag = 'smem constant byte address 0x4 - core index']
  #allocation1 [shape = 'u32[144,128]{1,0:T(1,128)}', space=vmem, size = 0x12000, scoped, tag = 'internal scratch']
  #allocation2 [shape = 'f32[16,512]{1,0:T(8,128)}', space=vmem, size = 0x8000, scoped, tag = 'scratch operand']
  %s0 = inlined_call_operand.hbm [shape: f32[2,16,256], index: 0, kind: input, shape index: {}]
  %s1 = inlined_call_operand.hbm [shape: f32[16,10], index: 1, kind: input, shape index: {}]
  %s2 = inlined_call_operand.hbm [shape: f32[2,16,256], index: 2, kind: output, shape index: {}]
  %s3 = sld [smem:[#allocation0]]
  $region49: #{tpu_custom_call.1} parent=0
    _
  %s5 = ssub.s32 1, %s3
  %s6 = scalar_select 0, %s5, %s3
  $region1: #{tpu_custom_call.1} parent=0
    #allocation3 [shape = 'u8[32768]{0}', space=vmem, size = 0x8000, scoped, tag = 'input window, operand 0']
    #allocation4 [shape = 's32[2]{0}', space=sflag, size = 0x8, scoped, tag = 'scoped memory for tpu_custom_call.1']
    #allocation5 [shape = 's32[2]{0}', space=sflag, size = 0x8, scoped, tag = 'scoped memory for tpu_custom_call.1']
    #allocation6 [shape = 'u8[8192]{0}', space=vmem, size = 0x2000, scoped, tag = 'input window, operand 1, single buffered']
    #allocation7 [shape = 's32[1]{0}', space=sflag, size = 0x4, scoped, tag = 'scoped memory for tpu_custom_call.1']
    #allocation8 [shape = 'u8[32768]{0}', space=vmem, size = 0x8000, scoped, tag = 'output window, operand 0']
    %7 = vsyncpa [#allocation4], 0
    %s8 = scalar_lea.sflag [#allocation4], 1
    %9 = vsyncpa %s8, 0
    %10 = vsyncpa [#allocation7], 0
    %11 = vsyncpa [#allocation5], 0
    %s12 = scalar_lea.sflag [#allocation5], 1
    %13 = vsyncpa %s12, 0
    loop: start=0, step=1, limit=4
    $region2: #{tpu_custom_call.1} parent=1 // loop_pre_header
      _
    $region3: #{tpu_custom_call.1} parent=1 // loop_header
      %s15 = sphi 0, %s19
      %p16 = scmp.ge.s32.totalorder %s15, 4
      %s22 = sphi 0, %s34
      %s23 = sphi 0, %s30
      %s24 = sphi 0, %s22
      %s25 = sphi 0, %s23
      %s26 = sphi 0, %s24
      %s27 = sphi 0, %s25
      %s39 = sphi 0, %s41
      %s42 = sphi 0, %s39
      %s43 = sphi 0, %s42
      %s59 = sphi 0, %s43
      %s65 = sphi 0, %s67
      %s68 = sphi 0, %s65
      %s69 = sphi 0, %s68
      %s85 = sphi 0, %s69
      %s93 = sphi 0, %s95
      %s96 = sphi 0, %s93
      %s97 = sphi 0, %s96
      %s113 = sphi 0, %s97
    $region4: #{tpu_custom_call.1} parent=1 // loop_header_branch
      %18 = sbr.rel (%p16) target = $region8
    $region5: #{tpu_custom_call.1} parent=1 // loop_body
      %s20 = ssub.s32 %s15, 1
      %s21 = ssub.s32 %s15, 2
      %s28 = sadd.s32 1, %s23
      %p29 = scmp.ge.s32.totalorder %s28, 1
      %s30 = scalar_select %p29, 0, %s28
      %s31 = sadd.s32 1, %s22
      %s32 = scalar_select %p29, %s31, %s22
      %p33 = scmp.ge.s32.totalorder %s32, 2
      %s34 = scalar_select %p33, 0, %s32
      %s35 = ssub.s32 %s22, %s34
      %s36 = ssub.s32 %s23, %s30
      %s37 = sor.u32 %s35, %s36
      %p38 = scmp.eq.s32.totalorder %s37, 0
      %s40 = sadd.s32 %s39, 1
      %s41 = scalar_select %p38, %s39, %s40
      %p44 = pneg %p38
      %p45 = scmp.eq.s32.totalorder %s15, 1
      %p46 = por %p44, %p45
      %p47 = scmp.ne.s32.totalorder %s39, %s42
      %p48 = scmp.eq.s32.totalorder %s15, 0
      %p49 = por %p47, %p48
      %p50 = scmp.ne.s32.totalorder %s39, %s42
      %p51 = scmp.eq.s32.totalorder %s20, 1
      %p52 = por %p50, %p51
      %p53 = scmp.ne.s32.totalorder %s42, %s43
      %p54 = scmp.eq.s32.totalorder %s20, 0
      %p55 = por %p53, %p54
      %p56 = scmp.ne.s32.totalorder %s42, %s43
      %p57 = scmp.eq.s32.totalorder %s21, 1
      %p58 = por %p56, %p57
      %p60 = scmp.ne.s32.totalorder %s43, %s59
      %p61 = scmp.eq.s32.totalorder %s21, 0
      %p62 = por %p60, %p61
      %s63 = ssub.s32 %s23, %s30
      %p64 = scmp.eq.s32.totalorder %s63, 0
      %s66 = sadd.s32 %s65, 1
      %s67 = scalar_select %p64, %s65, %s66
      %p70 = pneg %p64
      %p71 = scmp.eq.s32.totalorder %s15, 1
      %p72 = por %p70, %p71
      %p73 = scmp.ne.s32.totalorder %s65, %s68
      %p74 = scmp.eq.s32.totalorder %s15, 0
      %p75 = por %p73, %p74
      %p76 = scmp.ne.s32.totalorder %s65, %s68
      %p77 = scmp.eq.s32.totalorder %s20, 1
      %p78 = por %p76, %p77
      %p79 = scmp.ne.s32.totalorder %s68, %s69
      %p80 = scmp.eq.s32.totalorder %s20, 0
      %p81 = por %p79, %p80
      %p82 = scmp.ne.s32.totalorder %s68, %s69
      %p83 = scmp.eq.s32.totalorder %s21, 1
      %p84 = por %p82, %p83
      %p86 = scmp.ne.s32.totalorder %s69, %s85
      %p87 = scmp.eq.s32.totalorder %s21, 0
      %p88 = por %p86, %p87
      %s89 = ssub.s32 %s22, %s34
      %s90 = ssub.s32 %s23, %s30
      %s91 = sor.u32 %s89, %s90
      %p92 = scmp.eq.s32.totalorder %s91, 0
      %s94 = sadd.s32 %s93, 1
      %s95 = scalar_select %p92, %s93, %s94
      %p98 = pneg %p92
      %p99 = scmp.eq.s32.totalorder %s15, 1
      %p100 = por %p98, %p99
      %p101 = scmp.ne.s32.totalorder %s93, %s96
      %p102 = scmp.eq.s32.totalorder %s15, 0
      %p103 = por %p101, %p102
      %p104 = scmp.ne.s32.totalorder %s93, %s96
      %p105 = scmp.eq.s32.totalorder %s20, 1
      %p106 = por %p104, %p105
      %p107 = scmp.ne.s32.totalorder %s96, %s97
      %p108 = scmp.eq.s32.totalorder %s20, 0
      %p109 = por %p107, %p108
      %p110 = scmp.ne.s32.totalorder %s96, %s97
      %p111 = scmp.eq.s32.totalorder %s21, 1
      %p112 = por %p110, %p111
      %p114 = scmp.ne.s32.totalorder %s97, %s113
      %p115 = scmp.eq.s32.totalorder %s21, 0
      %p116 = por %p114, %p115
      %p117 = scmp.le.s32.totalorder 1, %s15
      %p118 = scmp.lt.s32.totalorder %s15, 3
      %p119 = pnand %p117, %p118
      %p120 = pneg %p119
      // Predicated region
      $region9: #{tpu_custom_call.1} parent=5 // pred_check
        _
      $region10: #{tpu_custom_call.1} parent=5 // pred_check_branch
        %122 = sbr.rel (%p119) target = $region12
      $region11: #{tpu_custom_call.1} parent=5 // pred_region
        %s123 = ssub.s32 %s15, 1
        // Predicated region
        $region13: #{tpu_custom_call.1} parent=11 // pred_check
          %p124 = pneg %p81
        $region14: #{tpu_custom_call.1} parent=11 // pred_check_branch
          %126 = sbr.rel (%p124) target = $region16
        $region15: #{tpu_custom_call.1} parent=11 // pred_region
          %s127 = smul.u32 2, %s25
          %s129 = ssub.s32 256, 256
          %130 = vsyncadd [#allocation7], %s129
          %s131 = smul.addr %s127, 128
          %s132 = scalar_lea.hbm %s1, %s131
          %s133 = sshll.u32 [#allocation6], 4
          %s134 = int_to_ptr.vmem [resolvable:$true] %s133
          %139 = dma.hbm_to_vmem [thread:$0]  %s132, 256, %s134, [#allocation7], 128, 128, 8
        $region16: #{tpu_custom_call.1} parent=11 // pred_fallthru
          _
      $region12: #{tpu_custom_call.1} parent=5 // pred_fallthru
        _
      %p140 = scmp.lt.s32.totalorder %s15, 2
      // Predicated region
      $region17: #{tpu_custom_call.1} parent=5 // pred_check
        %p141 = pneg %p140
      $region18: #{tpu_custom_call.1} parent=5 // pred_check_branch
        %143 = sbr.rel (%p141) target = $region20
      $region19: #{tpu_custom_call.1} parent=5 // pred_region
        // Predicated region
        $region21: #{tpu_custom_call.1} parent=19 // pred_check
          %p144 = pneg %p49
        $region22: #{tpu_custom_call.1} parent=19 // pred_check_branch
          %146 = sbr.rel (%p144) target = $region24
        $region23: #{tpu_custom_call.1} parent=19 // pred_region
          %s147 = sand.u32 %s39, 1
          %s148 = scalar_lea.sflag [#allocation4], %s147
          %s149 = sand.u32 %s39, 1
          %s150 = smul.addr %s149, 32
          %s151 = scalar_lea.vmem [#allocation3], %s150
          %s152 = smul.u32 2, %s23
          %s154 = ssub.s32 512, 512
          %155 = vsyncadd %s148, %s154
          %s156 = smul.addr %s152, 2
          %s157 = smul.addr %s22, 4
          %s158 = sadd.s32 %s156, %s157
          %s159 = smul.addr %s158, 128
          %s160 = scalar_lea.hbm %s0, %s159
          %s161 = sshll.u32 %s151, 4
          %s162 = int_to_ptr.vmem [resolvable:$true] %s161
          %167 = dma.hbm_to_vmem [thread:$0]  %s160, 512, %s162, %s148, 256, 256, 16
        $region24: #{tpu_custom_call.1} parent=19 // pred_fallthru
          _
      $region20: #{tpu_custom_call.1} parent=5 // pred_fallthru
        _
      %p168 = scmp.le.s32.totalorder 1, %s15
      %p169 = scmp.lt.s32.totalorder %s15, 3
      %p170 = pnand %p168, %p169
      %p171 = pneg %p170
      // Predicated region
      $region25: #{tpu_custom_call.1} parent=5 // pred_check
        _
      $region26: #{tpu_custom_call.1} parent=5 // pred_check_branch
        %173 = sbr.rel (%p170) target = $region28
      $region27: #{tpu_custom_call.1} parent=5 // pred_region
        %s174 = ssub.s32 %s15, 1
        %s175 = sand.u32 %s42, 1
        %s176 = scalar_lea.sflag [#allocation4], %s175
        %s177 = sand.u32 %s42, 1
        %s178 = smul.addr %s177, 32
        %s179 = scalar_lea.vmem [#allocation3], %s178
        // Predicated region
        $region29: #{tpu_custom_call.1} parent=27 // pred_check
          %p180 = pneg %p55
        $region30: #{tpu_custom_call.1} parent=27 // pred_check_branch
          %182 = sbr.rel (%p180) target = $region32
        $region31: #{tpu_custom_call.1} parent=27 // pred_region
          %183 = dma.done %s176, 512
        $region32: #{tpu_custom_call.1} parent=27 // pred_fallthru
          _
        // Predicated region
        $region33: #{tpu_custom_call.1} parent=27 // pred_check
          %p184 = pneg %p81
        $region34: #{tpu_custom_call.1} parent=27 // pred_check_branch
          %186 = sbr.rel (%p184) target = $region36
        $region35: #{tpu_custom_call.1} parent=27 // pred_region
          %187 = dma.done [#allocation7], 256
        $region36: #{tpu_custom_call.1} parent=27 // pred_fallthru
          _
        %s188 = sand.u32 %s42, 1
        %s189 = scalar_lea.sflag [#allocation4], %s188
        %s190 = sand.u32 %s42, 1
        %s191 = smul.addr %s190, 32
        %s192 = scalar_lea.vmem [#allocation3], %s191
        %p193 = pneg %p55
        %p194 = pneg %p52
        %p195 = pneg %p81
        %p196 = pneg %p78
        %p197 = pneg %p109
        %p198 = pneg %p106
        %s199 = sand.u32 %s96, 1
        %s200 = scalar_lea.sflag [#allocation5], %s199
        %s201 = sand.u32 %s96, 1
        %s202 = smul.addr %s201, 32
        %s203 = scalar_lea.vmem [#allocation8], %s202
        %s204 = smul.u32 2, %s25
        %s205 = smul.u32 2, %s25
        %s206 = smul.u32 2, %s25
        %v207 = vld [vmem:[#allocation6] sm:$0xff]
        %v208 = vld [vmem:[#allocation6 + $0x8] sm:$0xff]
        %209 = vst [vmem:[#allocation2] sm:$0xff] 0.0
        %210 = vst [vmem:[#allocation2 + $0x20] sm:$0xff] 0.0
        %211 = vst [vmem:[#allocation2 + $0x18] sm:$0xff] 0.0
        %212 = vst [vmem:[#allocation2 + $0x38] sm:$0xff] 0.0
        %v213 = vlaneseq
        %v214 = vand.u32 %v213, 127
        %v215 = vadd.s32 %v214, 128
        %vm216 = vcmp.lt.s32.totalorder %v214, 0
        %v217 = vsub.s32 0, %v214
        %v218 = vsel %vm216, %v217, %v214
        %v219 = vshrl.u32 %v218, 4
        %v220 = vand.u32 %v218, 15
        %v221 = vsub.s32 0, %v220
        %v222 = vsel %vm216, %v221, %v220
        %vm223 = vcmp.lt.s32.totalorder %v215, 0
        %v224 = vsub.s32 0, %v215
        %v225 = vsel %vm223, %v224, %v215
        %v226 = vshrl.u32 %v225, 4
        %v227 = vand.u32 %v225, 15
        %v228 = vsub.s32 0, %v227
        %v229 = vsel %vm223, %v228, %v227
        %v230 = vadd.s32 %v222, 4294967295
        %v231 = vadd.s32 %v229, 4294967295
        %vm232 = vcmp.ge.s32.totalorder %v230, 0
        %vm233 = vcmp.ge.s32.totalorder %v231, 0
        %v234 = vadd.s32 %v222, 1
        %v235 = vadd.s32 %v229, 1
        %vm236 = vcmp.le.s32.totalorder %v234, 15
        %vm237 = vcmp.le.s32.totalorder %v235, 15
        %v238 = vld [vmem:[%s179] sm:$0xff]
        %v239 = vld [vmem:[%s179 + $0x8] sm:$0xff]
        %v240 = vld [vmem:[%s179 + $0x10] sm:$0xff]
        %v241 = vld [vmem:[%s179 + $0x18] sm:$0xff]
        %242 = vst [vmem:[#allocation2 + $0x8] sm:$0xff] %v238
        %243 = vst [vmem:[#allocation2 + $0x10] sm:$0xff] %v239
        %244 = vst [vmem:[#allocation2 + $0x28] sm:$0xff] %v240
        %245 = vst [vmem:[#allocation2 + $0x30] sm:$0xff] %v241
        %247 = vset.pattern.permute.xlu0 9
        %248 = vperm.xlu0 %247, %v207
        %v249 = vpop.permute.xlu0 %248
        %252 = vset.pattern.permute.xlu0 9
        %253 = vperm.xlu0 %252, %v208
        %v254 = vpop.permute.xlu0 %253
        %v256 = vld [vmem:[#allocation2] sm:$0xff]
        %v257 = vld [vmem:[#allocation2 + $0x8] sm:$0xff]
        %v258 = vld [vmem:[#allocation2 + $0x10] sm:$0xff]
        %v259 = vld [vmem:[#allocation2 + $0x20] sm:$0xff]
        %v260 = vld [vmem:[#allocation2 + $0x28] sm:$0xff]
        %v261 = vld [vmem:[#allocation2 + $0x30] sm:$0xff]
        %262 = vset.pattern.permute.xlu0 0
        %263 = vperm.xlu0 %262, %v207
        %v264 = vpop.permute.xlu0 %263
        %266 = vset.pattern.permute.xlu0 0
        %267 = vperm.xlu0 %266, %v208
        %v268 = vpop.permute.xlu0 %267
        %v270 = vmul.f32 %v256, %v264
        %v271 = vmul.f32 %v257, %v264
        %v272 = vmul.f32 %v258, %v264
        %v273 = vmul.f32 %v259, %v268
        %v274 = vmul.f32 %v260, %v268
        %v275 = vmul.f32 %v261, %v268
        %276 = vset.pattern.permute.xlu0 3
        %277 = vperm.xlu0 %276, %v207
        %v278 = vpop.permute.xlu0 %277
        %280 = vset.pattern.permute.xlu0 3
        %281 = vperm.xlu0 %280, %v208
        %v282 = vpop.permute.xlu0 %281
        %v284 = vmul.f32 %v256, %v278
        %v285 = vmul.f32 %v257, %v278
        %v286 = vmul.f32 %v258, %v278
        %v287 = vmul.f32 %v259, %v282
        %v288 = vmul.f32 %v260, %v282
        %v289 = vmul.f32 %v261, %v282
        %296 = vrot.lane.b32.xlu0 %v284, 112
        %v297 = vpop.permute.xlu0 %296
        %298 = vrot.lane.b32.xlu0 %v285, 112
        %v299 = vpop.permute.xlu0 %298
        %300 = vrot.lane.b32.xlu0 %v286, 112
        %v301 = vpop.permute.xlu0 %300
        %302 = vrot.lane.b32.xlu0 %v287, 112
        %v303 = vpop.permute.xlu0 %302
        %304 = vrot.lane.b32.xlu0 %v288, 112
        %v305 = vpop.permute.xlu0 %304
        %306 = vrot.lane.b32.xlu0 %v289, 112
        %v307 = vpop.permute.xlu0 %306
        %vm308 = vcmask 916480
        %v309 = vsel %vm308, %v297, %v299
        %v310 = vsel %vm308, %v299, %v301
        %v311 = vsel %vm308, %v303, %v305
        %v312 = vsel %vm308, %v305, %v307
        %v319 = vadd.f32 %v270, %v309
        %v320 = vadd.f32 %v271, %v310
        %v321 = vadd.f32 %v272, %v301
        %v322 = vadd.f32 %v273, %v311
        %v323 = vadd.f32 %v274, %v312
        %v324 = vadd.f32 %v275, %v307
        %v325 = vld [vmem:[#allocation2 + $0x8] sm:$0xff]
        %v326 = vld [vmem:[#allocation2 + $0x10] sm:$0xff]
        %v327 = vld [vmem:[#allocation2 + $0x18] sm:$0xff]
        %v328 = vld [vmem:[#allocation2 + $0x28] sm:$0xff]
        %v329 = vld [vmem:[#allocation2 + $0x30] sm:$0xff]
        %v330 = vld [vmem:[#allocation2 + $0x38] sm:$0xff]
        %331 = vset.pattern.permute.xlu0 6
        %332 = vperm.xlu0 %331, %v207
        %v333 = vpop.permute.xlu0 %332
        %335 = vset.pattern.permute.xlu0 6
        %336 = vperm.xlu0 %335, %v208
        %v337 = vpop.permute.xlu0 %336
        %v339 = vmul.f32 %v325, %v333
        %v340 = vmul.f32 %v326, %v333
        %v341 = vmul.f32 %v327, %v333
        %v342 = vmul.f32 %v328, %v337
        %v343 = vmul.f32 %v329, %v337
        %v344 = vmul.f32 %v330, %v337
        %351 = vrot.lane.b32.xlu0 %v339, 96
        %v352 = vpop.permute.xlu0 %351
        %353 = vrot.lane.b32.xlu0 %v340, 96
        %v354 = vpop.permute.xlu0 %353
        %355 = vrot.lane.b32.xlu0 %v341, 96
        %v356 = vpop.permute.xlu0 %355
        %357 = vrot.lane.b32.xlu0 %v342, 96
        %v358 = vpop.permute.xlu0 %357
        %359 = vrot.lane.b32.xlu0 %v343, 96
        %v360 = vpop.permute.xlu0 %359
        %361 = vrot.lane.b32.xlu0 %v344, 96
        %v362 = vpop.permute.xlu0 %361
        %vm363 = vcmask 785408
        %v364 = vsel %vm363, %v352, %v354
        %v365 = vsel %vm363, %v354, %v356
        %v366 = vsel %vm363, %v358, %v360
        %v367 = vsel %vm363, %v360, %v362
        %v374 = vadd.f32 %v319, %v352
        %v375 = vadd.f32 %v320, %v364
        %v376 = vadd.f32 %v321, %v365
        %v377 = vadd.f32 %v322, %v358
        %v378 = vadd.f32 %v323, %v366
        %v379 = vadd.f32 %v324, %v367
        %v380 = vsel %vm232, 1, 0
        %v381 = vsel %vm233, 1, 0
        %vm382 = vcmp.eq.s32.totalorder %v380, 1
        %vm383 = vcmp.eq.s32.totalorder %v381, 1
        %390 = vrot.lane.b32.xlu0 %v374, 17
        %v391 = vpop.permute.xlu0 %390
        %392 = vrot.lane.b32.xlu0 %v375, 17
        %v393 = vpop.permute.xlu0 %392
        %394 = vrot.lane.b32.xlu0 %v376, 17
        %v395 = vpop.permute.xlu0 %394
        %396 = vrot.lane.b32.xlu0 %v377, 17
        %v397 = vpop.permute.xlu0 %396
        %398 = vrot.lane.b32.xlu0 %v378, 17
        %v399 = vpop.permute.xlu0 %398
        %400 = vrot.lane.b32.xlu0 %v379, 17
        %v401 = vpop.permute.xlu0 %400
        %vm402 = vcmask 138240
        %v403 = vsel %vm402, %v391, %v393
        %v404 = vsel %vm402, %v393, %v395
        %v405 = vsel %vm402, %v397, %v399
        %v406 = vsel %vm402, %v399, %v401
        %v411 = vsel %vm382, %v403, 0.0
        %v412 = vsel %vm383, %v404, 0.0
        %v413 = vsel %vm382, %v405, 0.0
        %v414 = vsel %vm383, %v406, 0.0
        %v415 = vadd.f32 %v249, %v411
        %v416 = vadd.f32 %v249, %v412
        %v417 = vadd.f32 %v254, %v413
        %v418 = vadd.f32 %v254, %v414
        %419 = vset.pattern.permute.xlu0 1
        %420 = vperm.xlu0 %419, %v207
        %v421 = vpop.permute.xlu0 %420
        %423 = vset.pattern.permute.xlu0 1
        %424 = vperm.xlu0 %423, %v208
        %v425 = vpop.permute.xlu0 %424
        %v427 = vmul.f32 %v256, %v421
        %v428 = vmul.f32 %v257, %v421
        %v429 = vmul.f32 %v258, %v421
        %v430 = vmul.f32 %v259, %v425
        %v431 = vmul.f32 %v260, %v425
        %v432 = vmul.f32 %v261, %v425
        %433 = vset.pattern.permute.xlu0 4
        %434 = vperm.xlu0 %433, %v207
        %v435 = vpop.permute.xlu0 %434
        %437 = vset.pattern.permute.xlu0 4
        %438 = vperm.xlu0 %437, %v208
        %v439 = vpop.permute.xlu0 %438
        %v441 = vmul.f32 %v257, %v435
        %v442 = vmul.f32 %v258, %v435
        %v443 = vmul.f32 %v260, %v439
        %v444 = vmul.f32 %v261, %v439
        %449 = vrot.lane.b32.xlu0 %v441, 112
        %v450 = vpop.permute.xlu0 %449
        %451 = vrot.lane.b32.xlu0 %v442, 112
        %v452 = vpop.permute.xlu0 %451
        %453 = vrot.lane.b32.xlu0 %v443, 112
        %v454 = vpop.permute.xlu0 %453
        %455 = vrot.lane.b32.xlu0 %v444, 112
        %v456 = vpop.permute.xlu0 %455
        %v457 = vsel %vm308, %v450, %v452
        %v458 = vsel %vm308, %v454, %v456
        %v465 = vadd.f32 %v427, %v450
        %v466 = vadd.f32 %v428, %v457
        %v467 = vadd.f32 %v429, %v452
        %v468 = vadd.f32 %v430, %v454
        %v469 = vadd.f32 %v431, %v458
        %v470 = vadd.f32 %v432, %v456
        %471 = vset.pattern.permute.xlu0 7
        %472 = vperm.xlu0 %471, %v207
        %v473 = vpop.permute.xlu0 %472
        %475 = vset.pattern.permute.xlu0 7
        %476 = vperm.xlu0 %475, %v208
        %v477 = vpop.permute.xlu0 %476
        %v479 = vmul.f32 %v325, %v473
        %v480 = vmul.f32 %v326, %v473
        %v481 = vmul.f32 %v327, %v473
        %v482 = vmul.f32 %v328, %v477
        %v483 = vmul.f32 %v329, %v477
        %v484 = vmul.f32 %v330, %v477
        %491 = vrot.lane.b32.xlu0 %v479, 96
        %v492 = vpop.permute.xlu0 %491
        %493 = vrot.lane.b32.xlu0 %v480, 96
        %v494 = vpop.permute.xlu0 %493
        %495 = vrot.lane.b32.xlu0 %v481, 96
        %v496 = vpop.permute.xlu0 %495
        %497 = vrot.lane.b32.xlu0 %v482, 96
        %v498 = vpop.permute.xlu0 %497
        %499 = vrot.lane.b32.xlu0 %v483, 96
        %v500 = vpop.permute.xlu0 %499
        %501 = vrot.lane.b32.xlu0 %v484, 96
        %v502 = vpop.permute.xlu0 %501
        %v503 = vsel %vm363, %v492, %v494
        %v504 = vsel %vm363, %v494, %v496
        %v505 = vsel %vm363, %v498, %v500
        %v506 = vsel %vm363, %v500, %v502
        %v513 = vadd.f32 %v465, %v492
        %v514 = vadd.f32 %v466, %v503
        %v515 = vadd.f32 %v467, %v504
        %v516 = vadd.f32 %v468, %v498
        %v517 = vadd.f32 %v469, %v505
        %v518 = vadd.f32 %v470, %v506
        %525 = vrot.lane.b32.xlu0 %v513, 16
        %v526 = vpop.permute.xlu0 %525
        %527 = vrot.lane.b32.xlu0 %v514, 16
        %v528 = vpop.permute.xlu0 %527
        %529 = vrot.lane.b32.xlu0 %v515, 16
        %v530 = vpop.permute.xlu0 %529
        %531 = vrot.lane.b32.xlu0 %v516, 16
        %v532 = vpop.permute.xlu0 %531
        %533 = vrot.lane.b32.xlu0 %v517, 16
        %v534 = vpop.permute.xlu0 %533
        %535 = vrot.lane.b32.xlu0 %v518, 16
        %v536 = vpop.permute.xlu0 %535
        %vm537 = vcmask 130048
        %v538 = vsel %vm537, %v526, %v528
        %v539 = vsel %vm537, %v528, %v530
        %v540 = vsel %vm537, %v532, %v534
        %v541 = vsel %vm537, %v534, %v536
        %v546 = vadd.f32 %v415, %v538
        %v547 = vadd.f32 %v416, %v539
        %v548 = vadd.f32 %v417, %v540
        %v549 = vadd.f32 %v418, %v541
        %550 = vset.pattern.permute.xlu0 2
        %551 = vperm.xlu0 %550, %v207
        %v552 = vpop.permute.xlu0 %551
        %554 = vset.pattern.permute.xlu0 2
        %555 = vperm.xlu0 %554, %v208
        %v556 = vpop.permute.xlu0 %555
        %v558 = vmul.f32 %v256, %v552
        %v559 = vmul.f32 %v257, %v552
        %v560 = vmul.f32 %v258, %v552
        %v561 = vmul.f32 %v259, %v556
        %v562 = vmul.f32 %v260, %v556
        %v563 = vmul.f32 %v261, %v556
        %564 = vset.pattern.permute.xlu0 5
        %565 = vperm.xlu0 %564, %v207
        %v566 = vpop.permute.xlu0 %565
        %568 = vset.pattern.permute.xlu0 5
        %569 = vperm.xlu0 %568, %v208
        %v570 = vpop.permute.xlu0 %569
        %v572 = vmul.f32 %v325, %v566
        %v573 = vmul.f32 %v326, %v566
        %v574 = vmul.f32 %v327, %v566
        %v575 = vmul.f32 %v328, %v570
        %v576 = vmul.f32 %v329, %v570
        %v577 = vmul.f32 %v330, %v570
        %584 = vrot.lane.b32.xlu0 %v572, 112
        %v585 = vpop.permute.xlu0 %584
        %586 = vrot.lane.b32.xlu0 %v573, 112
        %v587 = vpop.permute.xlu0 %586
        %588 = vrot.lane.b32.xlu0 %v574, 112
        %v589 = vpop.permute.xlu0 %588
        %590 = vrot.lane.b32.xlu0 %v575, 112
        %v591 = vpop.permute.xlu0 %590
        %592 = vrot.lane.b32.xlu0 %v576, 112
        %v593 = vpop.permute.xlu0 %592
        %594 = vrot.lane.b32.xlu0 %v577, 112
        %v595 = vpop.permute.xlu0 %594
        %v596 = vsel %vm308, %v585, %v587
        %v597 = vsel %vm308, %v587, %v589
        %v598 = vsel %vm308, %v591, %v593
        %v599 = vsel %vm308, %v593, %v595
        %v606 = vadd.f32 %v558, %v585
        %v607 = vadd.f32 %v559, %v596
        %v608 = vadd.f32 %v560, %v597
        %v609 = vadd.f32 %v561, %v591
        %v610 = vadd.f32 %v562, %v598
        %v611 = vadd.f32 %v563, %v599
        %612 = vset.pattern.permute.xlu0 8
        %613 = vperm.xlu0 %612, %v207
        %v614 = vpop.permute.xlu0 %613
        %616 = vset.pattern.permute.xlu0 8
        %617 = vperm.xlu0 %616, %v208
        %v618 = vpop.permute.xlu0 %617
        %v620 = vmul.f32 %v325, %v614
        %v621 = vmul.f32 %v326, %v614
        %v622 = vmul.f32 %v327, %v614
        %v623 = vmul.f32 %v328, %v618
        %v624 = vmul.f32 %v329, %v618
        %v625 = vmul.f32 %v330, %v618
        %632 = vrot.lane.b32.xlu0 %v620, 96
        %v633 = vpop.permute.xlu0 %632
        %634 = vrot.lane.b32.xlu0 %v621, 96
        %v635 = vpop.permute.xlu0 %634
        %636 = vrot.lane.b32.xlu0 %v622, 96
        %v637 = vpop.permute.xlu0 %636
        %638 = vrot.lane.b32.xlu0 %v623, 96
        %v639 = vpop.permute.xlu0 %638
        %640 = vrot.lane.b32.xlu0 %v624, 96
        %v641 = vpop.permute.xlu0 %640
        %642 = vrot.lane.b32.xlu0 %v625, 96
        %v643 = vpop.permute.xlu0 %642
        %v644 = vsel %vm363, %v633, %v635
        %v645 = vsel %vm363, %v635, %v637
        %v646 = vsel %vm363, %v639, %v641
        %v647 = vsel %vm363, %v641, %v643
        %v654 = vadd.f32 %v606, %v633
        %v655 = vadd.f32 %v607, %v644
        %v656 = vadd.f32 %v608, %v645
        %v657 = vadd.f32 %v609, %v639
        %v658 = vadd.f32 %v610, %v646
        %v659 = vadd.f32 %v611, %v647
        %v660 = vsel %vm236, 1, 0
        %v661 = vsel %vm237, 1, 0
        %vm662 = vcmp.eq.s32.totalorder %v660, 1
        %vm663 = vcmp.eq.s32.totalorder %v661, 1
        %670 = vrot.lane.b32.xlu0 %v654, 15
        %v671 = vpop.permute.xlu0 %670
        %672 = vrot.lane.b32.xlu0 %v655, 15
        %v673 = vpop.permute.xlu0 %672
        %674 = vrot.lane.b32.xlu0 %v656, 15
        %v675 = vpop.permute.xlu0 %674
        %676 = vrot.lane.b32.xlu0 %v657, 15
        %v677 = vpop.permute.xlu0 %676
        %678 = vrot.lane.b32.xlu0 %v658, 15
        %v679 = vpop.permute.xlu0 %678
        %680 = vrot.lane.b32.xlu0 %v659, 15
        %v681 = vpop.permute.xlu0 %680
        %vm682 = vcmask 121856
        %v683 = vsel %vm682, %v671, %v673
        %v684 = vsel %vm682, %v673, %v675
        %v685 = vsel %vm682, %v677, %v679
        %v686 = vsel %vm682, %v679, %v681
        %v691 = vsel %vm662, %v683, 0.0
        %v692 = vsel %vm663, %v684, 0.0
        %v693 = vsel %vm662, %v685, 0.0
        %v694 = vsel %vm663, %v686, 0.0
        %v695 = vadd.f32 %v546, %v691
        %v696 = vadd.f32 %v547, %v692
        %v697 = vadd.f32 %v548, %v693
        %v698 = vadd.f32 %v549, %v694
        %699 = vst [vmem:[%s203] sm:$0xff] %v695
        %700 = vst [vmem:[%s203 + $0x8] sm:$0xff] %v696
        %701 = vst [vmem:[%s203 + $0x10] sm:$0xff] %v697
        %702 = vst [vmem:[%s203 + $0x18] sm:$0xff] %v698
        %s703 = sand.u32 %s96, 1
        %s704 = scalar_lea.sflag [#allocation5], %s703
        %s705 = sand.u32 %s96, 1
        %s706 = smul.addr %s705, 32
        %s707 = scalar_lea.vmem [#allocation8], %s706
        // Predicated region
        $region37: #{tpu_custom_call.1} parent=27 // pred_check
          %p708 = pneg %p106
        $region38: #{tpu_custom_call.1} parent=27 // pred_check_branch
          %710 = sbr.rel (%p708) target = $region40
        $region39: #{tpu_custom_call.1} parent=27 // pred_region
          %s711 = smul.u32 2, %s25
          %s713 = ssub.s32 512, 512
          %714 = vsyncadd %s704, %s713
          %s715 = smul.addr %s711, 2
          %s716 = smul.addr %s24, 4
          %s717 = sadd.s32 %s715, %s716
          %s718 = smul.addr %s717, 128
          %s719 = scalar_lea.hbm %s2, %s718
          %s720 = sshll.u32 %s707, 4
          %s721 = int_to_ptr.vmem [resolvable:$true] %s720
          %726 = dma.vmem_to_hbm [thread:$0]  %s721, 512, %s719, %s704, 256, 256, 16
        $region40: #{tpu_custom_call.1} parent=27 // pred_fallthru
          _
      $region28: #{tpu_custom_call.1} parent=5 // pred_fallthru
        _
      %p727 = scmp.le.s32.totalorder 2, %s15
      // Predicated region
      $region41: #{tpu_custom_call.1} parent=5 // pred_check
        %p728 = pneg %p727
      $region42: #{tpu_custom_call.1} parent=5 // pred_check_branch
        %730 = sbr.rel (%p728) target = $region44
      $region43: #{tpu_custom_call.1} parent=5 // pred_region
        %s731 = ssub.s32 %s15, 2
        // Predicated region
        $region45: #{tpu_custom_call.1} parent=43 // pred_check
          %p732 = pneg %p112
        $region46: #{tpu_custom_call.1} parent=43 // pred_check_branch
          %734 = sbr.rel (%p732) target = $region48
        $region47: #{tpu_custom_call.1} parent=43 // pred_region
          %s735 = sand.u32 %s97, 1
          %s736 = scalar_lea.sflag [#allocation5], %s735
          %s737 = sand.u32 %s97, 1
          %s738 = smul.addr %s737, 32
          %s739 = scalar_lea.vmem [#allocation8], %s738
          %740 = dma.done %s736, 512
        $region48: #{tpu_custom_call.1} parent=43 // pred_fallthru
          _
      $region44: #{tpu_custom_call.1} parent=5 // pred_fallthru
        _
    $region6: #{tpu_custom_call.1} parent=1 // loop_footer
      %s19 = sadd.s32 1, %s15
    $region7: #{tpu_custom_call.1} parent=1 // loop_footer_branch
      %14 = sbr.rel target = $region3
    $region8: #{tpu_custom_call.1} parent=1 // loop_exit
      _
    %741 = vsyncpa [#allocation4], 1
    %s742 = scalar_lea.sflag [#allocation4], 1
    %743 = vsyncpa %s742, 1
    %744 = vsyncpa [#allocation7], 1
    %745 = vsyncpa [#allocation5], 1
    %s746 = scalar_lea.sflag [#allocation5], 1
    %747 = vsyncpa %s746, 1

</llo_original>
